<compile_context>
chip_gen: v7x
topology: tpu7x:2x2x1
jax: 0.10.0
libtpu: 0.0.40
codegen_flags: <defaults>
</compile_context>

<pallas_src>
import functools

import jax
import jax.numpy as jnp
from jax import lax
from jax.experimental import pallas as pl
from jax.experimental.pallas import tpu as pltpu

BATCH = 2
CHAN = 128        # chan_in == chan_out (depthwise: groups == chan_in)
SEQLEN = 32
KSIZE = 5
PADDING = (2, 2)  # "same" padding for kernel_size 5 (conformer usage)


def _dwconv_kernel(x_ref, w_ref, b_ref, o_ref, *, ksize, pad_l, l_out):
    """Depthwise conv in the raw PyTorch layout, padding fused via lane rolls.

    x_ref : (1, C, N)    activation block (channels on sublanes, seq on lanes).
    w_ref : (C, K)       depthwise taps.
    b_ref : (C, 1)       bias.
    o_ref : (1, C, Lout) output block (same layout as the input).
    """
    c, n = x_ref.shape[1], x_ref.shape[2]
    x = x_ref[0].astype(jnp.float32)            # (C, N), f32 accumulation
    w = w_ref[...].astype(jnp.float32)          # (C, K), single hoisted load
    lane = lax.broadcasted_iota(jnp.int32, (c, n), 1)

    def tap(k):
        # out[:, t] needs x[:, t + d]; a circular lane rotation by -d brings
        # that element to lane t, and a static mask zeroes the wrapped lanes
        # (this is exactly the zero padding of F.pad).  Rolls run on the XLU,
        # off the VPU's critical path.
        d = k - pad_l
        if d == 0:
            xs = x
        else:
            xs = pltpu.roll(x, (-d) % n, axis=1)
            if d < 0:
                xs = jnp.where(lane >= -d, xs, 0.0)       # left padding
            else:
                xs = jnp.where(lane < n - d, xs, 0.0)     # right padding
        return xs * w[:, k:k + 1]                         # lane-broadcast weight

    # Fold tap 0 and the bias into the accumulator init: no zero-fill, no
    # trailing bias add.
    acc = tap(0) + b_ref[...].astype(jnp.float32)
    for k in range(1, ksize):                             # K tiny & static
        acc = acc + tap(k)
    o_ref[0] = acc[:, :l_out].astype(o_ref.dtype)         # full-block store


def depthwise_conv1d(x, weight, bias, padding):
    """x: (B, C, N); weight: (C, 1, K) (PyTorch Conv1d layout); bias: (C,)."""
    B, C, N = x.shape
    K = weight.shape[-1]
    pad_l, pad_r = padding
    l_out = N + pad_l + pad_r - K + 1
    assert l_out >= 1, "degenerate config: empty output"
    assert l_out <= N, "kernel assumes pad_l + pad_r <= K - 1 (Lout <= N)"

    # Metadata-only reshapes (no data movement); all activation layout /
    # padding work happens inside the kernel.
    w2 = weight.reshape(C, K)
    b2 = bias.reshape(C, 1)

    kernel = functools.partial(_dwconv_kernel, ksize=K, pad_l=pad_l,
                               l_out=l_out)
    return pl.pallas_call(
        kernel,
        out_shape=jax.ShapeDtypeStruct((B, C, l_out), x.dtype),
        grid=(B,),
        in_specs=[pl.BlockSpec((1, C, N), lambda b: (b, 0, 0)),
                  pl.BlockSpec((C, K), lambda b: (0, 0)),
                  pl.BlockSpec((C, 1), lambda b: (0, 0))],
        out_specs=pl.BlockSpec((1, C, l_out), lambda b: (b, 0, 0)),
        compiler_params=pltpu.CompilerParams(
            dimension_semantics=("parallel",)),
    )(x, w2, b2)


# ---------------------------- pure-JAX reference ------------------------------
def reference_forward(x, weight, bias, padding):
    pad_l, pad_r = padding
    K = weight.shape[-1]
    xp = jnp.pad(x, ((0, 0), (0, 0), (pad_l, pad_r)))       # (B, C, Lp)
    l_out = xp.shape[-1] - K + 1
    out = sum(xp[:, :, k:k + l_out] * weight[:, 0, k][None, :, None]
              for k in range(K))
    return out + bias[None, :, None]


if __name__ == "__main__":
    key = jax.random.PRNGKey(0)
    kx, kw, kb = jax.random.split(key, 3)
    x = jax.random.normal(kx, (BATCH, CHAN, SEQLEN), jnp.float32)
    weight = jax.random.normal(kw, (CHAN, 1, KSIZE), jnp.float32) * 0.2
    bias = jax.random.normal(kb, (CHAN,), jnp.float32) * 0.05

    fwd = jax.jit(functools.partial(depthwise_conv1d, padding=PADDING))
    out = jax.block_until_ready(fwd(x, weight, bias))
    ref = jax.block_until_ready(reference_forward(x, weight, bias, PADDING))

    ok = bool(jnp.all(jnp.isfinite(out))) and bool(
        jnp.allclose(out, ref, rtol=1e-4, atol=1e-4))
    if not ok:
        raise SystemExit("mismatch: max abs diff = %g"
                         % float(jnp.max(jnp.abs(out - ref))))
    print("KERNEL_OK")
</pallas_src>

<mosaic_0001>
module attributes {stable_mosaic.version = 11 : i64} {
  func.func @_dwconv_kernel(%arg0: i32, %arg1: memref<1x128x32xf32, #tpu.memory_space<vmem>>, %arg2: memref<128x5xf32, #tpu.memory_space<vmem>>, %arg3: memref<128x1xf32, #tpu.memory_space<vmem>>, %arg4: memref<1x128x32xf32, #tpu.memory_space<vmem>>) attributes {dimension_semantics = [#tpu.dimension_semantics<parallel>], iteration_bounds = array<i64: 2>, scalar_prefetch = 0 : i64, scratch_operands = 0 : i64, tpu.core_type = #tpu.core_type<tc>, window_params = [{transform_indices = @transform_0, window_bounds = array<i64: 1, 128, 32>}, {pipeline_mode = #tpu.pipeline_mode<synchronous>, transform_indices = @transform_1, window_bounds = array<i64: 128, 5>}, {pipeline_mode = #tpu.pipeline_mode<synchronous>, transform_indices = @transform_2, window_bounds = array<i64: 128, 1>}, {transform_indices = @transform_3, window_bounds = array<i64: 1, 128, 32>}]} {
    %c0 = arith.constant 0 : index
    %c0_0 = arith.constant 0 : index
    %c0_1 = arith.constant 0 : index
    %0 = vector.load %arg1[%c0, %c0_0, %c0_1] : memref<1x128x32xf32, #tpu.memory_space<vmem>>, vector<1x128x32xf32>
    %1 = vector.shape_cast %0 : vector<1x128x32xf32> to vector<128x32xf32>
    %c0_2 = arith.constant 0 : index
    %c0_3 = arith.constant 0 : index
    %2 = vector.load %arg2[%c0_2, %c0_3] : memref<128x5xf32, #tpu.memory_space<vmem>>, vector<128x5xf32>
    %3 = tpu.iota {dimensions = array<i32: 1>} : vector<128x32xi32>
    %c2_i32 = arith.constant 2 : i32
    %4 = tpu.dynamic_rotate %1 by %c2_i32 dim 1 : vector<128x32xf32>, i32 -> vector<128x32xf32>
    %c2_i32_4 = arith.constant 2 : i32
    %5 = vector.broadcast %c2_i32_4 : i32 to vector<128x32xi32>
    %6 = arith.cmpi sge, %3, %5 : vector<128x32xi32>
    %cst = arith.constant 0.000000e+00 : f32
    %7 = vector.broadcast %cst : f32 to vector<128x32xf32>
    %8 = arith.select %6, %4, %7 : vector<128x32xi1>, vector<128x32xf32>
    %9 = vector.extract_strided_slice %2 {offsets = [0, 0], sizes = [128, 1], strides = [1, 1]} : vector<128x5xf32> to vector<128x1xf32>
    %10 = vector.broadcast %9 : vector<128x1xf32> to vector<128x32xf32>
    %11 = arith.mulf %8, %10 : vector<128x32xf32>
    %c0_5 = arith.constant 0 : index
    %c0_6 = arith.constant 0 : index
    %12 = vector.load %arg3[%c0_5, %c0_6] : memref<128x1xf32, #tpu.memory_space<vmem>>, vector<128x1xf32>
    %13 = vector.broadcast %12 : vector<128x1xf32> to vector<128x32xf32>
    %14 = arith.addf %11, %13 : vector<128x32xf32>
    %c1_i32 = arith.constant 1 : i32
    %15 = tpu.dynamic_rotate %1 by %c1_i32 dim 1 : vector<128x32xf32>, i32 -> vector<128x32xf32>
    %c1_i32_7 = arith.constant 1 : i32
    %16 = vector.broadcast %c1_i32_7 : i32 to vector<128x32xi32>
    %17 = arith.cmpi sge, %3, %16 : vector<128x32xi32>
    %cst_8 = arith.constant 0.000000e+00 : f32
    %18 = vector.broadcast %cst_8 : f32 to vector<128x32xf32>
    %19 = arith.select %17, %15, %18 : vector<128x32xi1>, vector<128x32xf32>
    %20 = vector.extract_strided_slice %2 {offsets = [0, 1], sizes = [128, 1], strides = [1, 1]} : vector<128x5xf32> to vector<128x1xf32>
    %21 = vector.broadcast %20 : vector<128x1xf32> to vector<128x32xf32>
    %22 = arith.mulf %19, %21 : vector<128x32xf32>
    %23 = arith.addf %14, %22 : vector<128x32xf32>
    %24 = vector.extract_strided_slice %2 {offsets = [0, 2], sizes = [128, 1], strides = [1, 1]} : vector<128x5xf32> to vector<128x1xf32>
    %25 = vector.broadcast %24 : vector<128x1xf32> to vector<128x32xf32>
    %26 = arith.mulf %1, %25 : vector<128x32xf32>
    %27 = arith.addf %23, %26 : vector<128x32xf32>
    %c31_i32 = arith.constant 31 : i32
    %28 = tpu.dynamic_rotate %1 by %c31_i32 dim 1 : vector<128x32xf32>, i32 -> vector<128x32xf32>
    %c31_i32_9 = arith.constant 31 : i32
    %29 = vector.broadcast %c31_i32_9 : i32 to vector<128x32xi32>
    %30 = arith.cmpi slt, %3, %29 : vector<128x32xi32>
    %cst_10 = arith.constant 0.000000e+00 : f32
    %31 = vector.broadcast %cst_10 : f32 to vector<128x32xf32>
    %32 = arith.select %30, %28, %31 : vector<128x32xi1>, vector<128x32xf32>
    %33 = vector.extract_strided_slice %2 {offsets = [0, 3], sizes = [128, 1], strides = [1, 1]} : vector<128x5xf32> to vector<128x1xf32>
    %34 = vector.broadcast %33 : vector<128x1xf32> to vector<128x32xf32>
    %35 = arith.mulf %32, %34 : vector<128x32xf32>
    %36 = arith.addf %27, %35 : vector<128x32xf32>
    %c30_i32 = arith.constant 30 : i32
    %37 = tpu.dynamic_rotate %1 by %c30_i32 dim 1 : vector<128x32xf32>, i32 -> vector<128x32xf32>
    %c30_i32_11 = arith.constant 30 : i32
    %38 = vector.broadcast %c30_i32_11 : i32 to vector<128x32xi32>
    %39 = arith.cmpi slt, %3, %38 : vector<128x32xi32>
    %cst_12 = arith.constant 0.000000e+00 : f32
    %40 = vector.broadcast %cst_12 : f32 to vector<128x32xf32>
    %41 = arith.select %39, %37, %40 : vector<128x32xi1>, vector<128x32xf32>
    %42 = vector.extract_strided_slice %2 {offsets = [0, 4], sizes = [128, 1], strides = [1, 1]} : vector<128x5xf32> to vector<128x1xf32>
    %43 = vector.broadcast %42 : vector<128x1xf32> to vector<128x32xf32>
    %44 = arith.mulf %41, %43 : vector<128x32xf32>
    %45 = arith.addf %36, %44 : vector<128x32xf32>
    %c0_13 = arith.constant 0 : index
    %c0_14 = arith.constant 0 : index
    %c0_15 = arith.constant 0 : index
    %46 = vector.load %arg4[%c0_13, %c0_14, %c0_15] : memref<1x128x32xf32, #tpu.memory_space<vmem>>, vector<1x128x32xf32>
    %47 = vector.shape_cast %46 : vector<1x128x32xf32> to vector<128x32xf32>
    %48 = vector.shape_cast %45 : vector<128x32xf32> to vector<1x128x32xf32>
    tpu.vector_store %arg4[%c0_13, %c0_14, %c0_15], %48 {strides = array<i32>} : memref<1x128x32xf32, #tpu.memory_space<vmem>>, vector<1x128x32xf32>,
    return
  }
  func.func @transform_0(%arg0: i32) -> (i32, i32, i32) {
    %c0_i32 = arith.constant 0 : i32
    %c0_i32_0 = arith.constant 0 : i32
    %c0_i32_1 = arith.constant 0 : i32
    return %arg0, %c0_i32, %c0_i32_0 : i32, i32, i32
  }
  func.func @transform_1(%arg0: i32) -> (i32, i32) {
    %c0_i32 = arith.constant 0 : i32
    %c0_i32_0 = arith.constant 0 : i32
    %c0_i32_1 = arith.constant 0 : i32
    return %c0_i32, %c0_i32_0 : i32, i32
  }
  func.func @transform_2(%arg0: i32) -> (i32, i32) {
    %c0_i32 = arith.constant 0 : i32
    %c0_i32_0 = arith.constant 0 : i32
    %c0_i32_1 = arith.constant 0 : i32
    return %c0_i32, %c0_i32_0 : i32, i32
  }
  func.func @transform_3(%arg0: i32) -> (i32, i32, i32) {
    %c0_i32 = arith.constant 0 : i32
    %c0_i32_0 = arith.constant 0 : i32
    %c0_i32_1 = arith.constant 0 : i32
    return %arg0, %c0_i32, %c0_i32_0 : i32, i32, i32
  }
}

</mosaic_0001>

<llo_original>
// kernel: depthwise_conv1d.1
$region0: #{depthwise_conv1d.1}
  #allocation0 [shape = 'u32[]', space=smem, size = 0x4, offset = 0x4, fixed_abs, tag = 'smem constant byte address 0x4 - core index']
  #allocation1 [shape = 'u32[144,128]{1,0:T(1,128)}', space=vmem, size = 0x12000, scoped, tag = 'internal scratch']
  %s0 = inlined_call_operand.vmem [shape: f32[2,128,32], index: 0, kind: input, shape index: {}]
  %s1 = inlined_call_operand.vmem [shape: f32[128,5], index: 1, kind: input, shape index: {}]
  %s2 = inlined_call_operand.vmem [shape: f32[128,1], index: 2, kind: input, shape index: {}]
  %s3 = inlined_call_operand.vmem [shape: f32[2,128,32], index: 3, kind: output, shape index: {}]
  %s4 = sld [smem:[#allocation0]]
  $region45: #{depthwise_conv1d.1} parent=0
    _
  %s6 = ssub.s32 1, %s4
  %s7 = scalar_select 0, %s6, %s4
  loop: start=0, step=1, limit=4
  $region2: #{depthwise_conv1d.1} parent=0 // loop_pre_header
    _
  $region3: #{depthwise_conv1d.1} parent=0 // loop_header
    %s9 = sphi 0, %s13
    %p10 = scmp.ge.s32.totalorder %s9, 4
    %s19 = sphi 0, %s21
    %s22 = sphi 0, %s19
    %s23 = sphi 0, %s22
    %s39 = sphi 0, %s23
    %s43 = sphi 0, %s43
    %s45 = sphi 0, %s43
    %s46 = sphi 0, %s45
    %s60 = sphi 0, %s46
    %s64 = sphi 0, %s64
    %s66 = sphi 0, %s64
    %s67 = sphi 0, %s66
    %s81 = sphi 0, %s67
    %s87 = sphi 0, %s89
    %s90 = sphi 0, %s87
    %s91 = sphi 0, %s90
    %s107 = sphi 0, %s91
  $region4: #{depthwise_conv1d.1} parent=0 // loop_header_branch
    %12 = sbr.rel (%p10) target = $region8
  $region5: #{depthwise_conv1d.1} parent=0 // loop_body
    %s14 = ssub.s32 %s9, 1
    %s15 = ssub.s32 %s9, 2
    %s16 = sadd.s32 %s9, 1
    %s17 = ssub.s32 %s9, %s16
    %p18 = scmp.eq.s32.totalorder %s17, 0
    %s20 = sadd.s32 %s19, 1
    %s21 = scalar_select %p18, %s19, %s20
    %p24 = pneg %p18
    %p25 = scmp.eq.s32.totalorder %s9, 1
    %p26 = por %p24, %p25
    %p27 = scmp.ne.s32.totalorder %s19, %s22
    %p28 = scmp.eq.s32.totalorder %s9, 0
    %p29 = por %p27, %p28
    %p30 = scmp.ne.s32.totalorder %s19, %s22
    %p31 = scmp.eq.s32.totalorder %s14, 1
    %p32 = por %p30, %p31
    %p33 = scmp.ne.s32.totalorder %s22, %s23
    %p34 = scmp.eq.s32.totalorder %s14, 0
    %p35 = por %p33, %p34
    %p36 = scmp.ne.s32.totalorder %s22, %s23
    %p37 = scmp.eq.s32.totalorder %s15, 1
    %p38 = por %p36, %p37
    %p40 = scmp.ne.s32.totalorder %s23, %s39
    %p41 = scmp.eq.s32.totalorder %s15, 0
    %p42 = por %p40, %p41
    %s44 = sadd.s32 %s43, 1
    %p47 = scmp.eq.s32.totalorder %s9, 1
    %p48 = scmp.ne.s32.totalorder %s43, %s45
    %p49 = scmp.eq.s32.totalorder %s9, 0
    %p50 = por %p48, %p49
    %p51 = scmp.ne.s32.totalorder %s43, %s45
    %p52 = scmp.eq.s32.totalorder %s14, 1
    %p53 = por %p51, %p52
    %p54 = scmp.ne.s32.totalorder %s45, %s46
    %p55 = scmp.eq.s32.totalorder %s14, 0
    %p56 = por %p54, %p55
    %p57 = scmp.ne.s32.totalorder %s45, %s46
    %p58 = scmp.eq.s32.totalorder %s15, 1
    %p59 = por %p57, %p58
    %p61 = scmp.ne.s32.totalorder %s46, %s60
    %p62 = scmp.eq.s32.totalorder %s15, 0
    %p63 = por %p61, %p62
    %s65 = sadd.s32 %s64, 1
    %p68 = scmp.eq.s32.totalorder %s9, 1
    %p69 = scmp.ne.s32.totalorder %s64, %s66
    %p70 = scmp.eq.s32.totalorder %s9, 0
    %p71 = por %p69, %p70
    %p72 = scmp.ne.s32.totalorder %s64, %s66
    %p73 = scmp.eq.s32.totalorder %s14, 1
    %p74 = por %p72, %p73
    %p75 = scmp.ne.s32.totalorder %s66, %s67
    %p76 = scmp.eq.s32.totalorder %s14, 0
    %p77 = por %p75, %p76
    %p78 = scmp.ne.s32.totalorder %s66, %s67
    %p79 = scmp.eq.s32.totalorder %s15, 1
    %p80 = por %p78, %p79
    %p82 = scmp.ne.s32.totalorder %s67, %s81
    %p83 = scmp.eq.s32.totalorder %s15, 0
    %p84 = por %p82, %p83
    %s85 = ssub.s32 %s9, %s16
    %p86 = scmp.eq.s32.totalorder %s85, 0
    %s88 = sadd.s32 %s87, 1
    %s89 = scalar_select %p86, %s87, %s88
    %p92 = pneg %p86
    %p93 = scmp.eq.s32.totalorder %s9, 1
    %p94 = por %p92, %p93
    %p95 = scmp.ne.s32.totalorder %s87, %s90
    %p96 = scmp.eq.s32.totalorder %s9, 0
    %p97 = por %p95, %p96
    %p98 = scmp.ne.s32.totalorder %s87, %s90
    %p99 = scmp.eq.s32.totalorder %s14, 1
    %p100 = por %p98, %p99
    %p101 = scmp.ne.s32.totalorder %s90, %s91
    %p102 = scmp.eq.s32.totalorder %s14, 0
    %p103 = por %p101, %p102
    %p104 = scmp.ne.s32.totalorder %s90, %s91
    %p105 = scmp.eq.s32.totalorder %s15, 1
    %p106 = por %p104, %p105
    %p108 = scmp.ne.s32.totalorder %s91, %s107
    %p109 = scmp.eq.s32.totalorder %s15, 0
    %p110 = por %p108, %p109
    %p111 = scmp.le.s32.totalorder 1, %s9
    %p112 = scmp.lt.s32.totalorder %s9, 3
    %p113 = pnand %p111, %p112
    %p114 = pneg %p113
    // Predicated region
    $region9: #{depthwise_conv1d.1} parent=5 // pred_check
      _
    $region10: #{depthwise_conv1d.1} parent=5 // pred_check_branch
      %116 = sbr.rel (%p113) target = $region12
    $region11: #{depthwise_conv1d.1} parent=5 // pred_region
      %s117 = ssub.s32 %s9, 1
      // Predicated region
      $region13: #{depthwise_conv1d.1} parent=11 // pred_check
        %p118 = pneg %p56
      $region14: #{depthwise_conv1d.1} parent=11 // pred_check_branch
        %120 = sbr.rel (%p118) target = $region16
      $region15: #{depthwise_conv1d.1} parent=11 // pred_region
        _
      $region16: #{depthwise_conv1d.1} parent=11 // pred_fallthru
        _
      // Predicated region
      $region17: #{depthwise_conv1d.1} parent=11 // pred_check
        %p121 = pneg %p77
      $region18: #{depthwise_conv1d.1} parent=11 // pred_check_branch
        %123 = sbr.rel (%p121) target = $region20
      $region19: #{depthwise_conv1d.1} parent=11 // pred_region
        _
      $region20: #{depthwise_conv1d.1} parent=11 // pred_fallthru
        _
    $region12: #{depthwise_conv1d.1} parent=5 // pred_fallthru
      _
    %p124 = scmp.lt.s32.totalorder %s9, 2
    // Predicated region
    $region21: #{depthwise_conv1d.1} parent=5 // pred_check
      %p125 = pneg %p124
    $region22: #{depthwise_conv1d.1} parent=5 // pred_check_branch
      %127 = sbr.rel (%p125) target = $region24
    $region23: #{depthwise_conv1d.1} parent=5 // pred_region
      // Predicated region
      $region25: #{depthwise_conv1d.1} parent=23 // pred_check
        %p128 = pneg %p29
      $region26: #{depthwise_conv1d.1} parent=23 // pred_check_branch
        %130 = sbr.rel (%p128) target = $region28
      $region27: #{depthwise_conv1d.1} parent=23 // pred_region
        %p131 = scmp.lt.s32.totalorder %s9, 1
        %s132 = scalar_select %p131, %s9, 1
        %s133 = smul.addr %s132, 16
        %s134 = smul.addr %s133, 8
        %s135 = scalar_lea.vmem %s0, %s134
      $region28: #{depthwise_conv1d.1} parent=23 // pred_fallthru
        _
    $region24: #{depthwise_conv1d.1} parent=5 // pred_fallthru
      _
    %p136 = scmp.le.s32.totalorder 1, %s9
    %p137 = scmp.lt.s32.totalorder %s9, 3
    %p138 = pnand %p136, %p137
    %p139 = pneg %p138
    // Predicated region
    $region29: #{depthwise_conv1d.1} parent=5 // pred_check
      _
    $region30: #{depthwise_conv1d.1} parent=5 // pred_check_branch
      %141 = sbr.rel (%p138) target = $region32
    $region31: #{depthwise_conv1d.1} parent=5 // pred_region
      %s142 = ssub.s32 %s9, 1
      %p143 = scmp.lt.s32.totalorder %s14, 1
      %s144 = scalar_select %p143, %s14, 1
      %s145 = smul.addr %s144, 16
      %s146 = smul.addr %s145, 8
      %s147 = scalar_lea.vmem %s0, %s146
      %p148 = pneg %p35
      %p149 = pneg %p32
      %p150 = pneg %p56
      %p151 = pneg %p53
      %p152 = pneg %p77
      %p153 = pneg %p74
      %p154 = pneg %p103
      %p155 = pneg %p100
      %p156 = scmp.lt.s32.totalorder %s14, 1
      %s157 = scalar_select %p156, %s14, 1
      %s158 = smul.addr %s157, 16
      %s159 = smul.addr %s158, 8
      %s160 = scalar_lea.vmem %s3, %s159
      %p161 = scmp.lt.s32.totalorder %s14, 1
      %s162 = scalar_select %p161, %s14, 1
      %s163 = smul.addr %s162, 16
      %s164 = smul.addr %s163, 8
      %s165 = scalar_lea.vmem %s0, %s164
      %p166 = scmp.lt.s32.totalorder %s14, 1
      %s167 = scalar_select %p166, %s14, 1
      %s168 = smul.addr %s167, 16
      %s169 = smul.addr %s168, 8
      %s170 = scalar_lea.vmem %s3, %s169
      %v171 = vld [vmem:[%s165] sm:$0xff]
      %v172 = vld [vmem:[%s165 + $0x8] sm:$0xff]
      %v173 = vld [vmem:[%s165 + $0x10] sm:$0xff]
      %v174 = vld [vmem:[%s165 + $0x18] sm:$0xff]
      %v175 = vld [vmem:[%s165 + $0x20] sm:$0xff]
      %v176 = vld [vmem:[%s165 + $0x28] sm:$0xff]
      %v177 = vld [vmem:[%s165 + $0x30] sm:$0xff]
      %v178 = vld [vmem:[%s165 + $0x38] sm:$0xff]
      %v179 = vld [vmem:[%s165 + $0x40] sm:$0xff]
      %v180 = vld [vmem:[%s165 + $0x48] sm:$0xff]
      %v181 = vld [vmem:[%s165 + $0x50] sm:$0xff]
      %v182 = vld [vmem:[%s165 + $0x58] sm:$0xff]
      %v183 = vld [vmem:[%s165 + $0x60] sm:$0xff]
      %v184 = vld [vmem:[%s165 + $0x68] sm:$0xff]
      %v185 = vld [vmem:[%s165 + $0x70] sm:$0xff]
      %v186 = vld [vmem:[%s165 + $0x78] sm:$0xff]
      %v187 = vld [vmem:[%s1] sm:$0xff]
      %v188 = vld [vmem:[%s1 + $0x8] sm:$0xff]
      %v189 = vld [vmem:[%s1 + $0x10] sm:$0xff]
      %v190 = vld [vmem:[%s1 + $0x18] sm:$0xff]
      %v191 = vld [vmem:[%s1 + $0x20] sm:$0xff]
      %v192 = vld [vmem:[%s1 + $0x28] sm:$0xff]
      %v193 = vld [vmem:[%s1 + $0x30] sm:$0xff]
      %v194 = vld [vmem:[%s1 + $0x38] sm:$0xff]
      %v195 = vld [vmem:[%s1 + $0x40] sm:$0xff]
      %v196 = vld [vmem:[%s1 + $0x48] sm:$0xff]
      %v197 = vld [vmem:[%s1 + $0x50] sm:$0xff]
      %v198 = vld [vmem:[%s1 + $0x58] sm:$0xff]
      %v199 = vld [vmem:[%s1 + $0x60] sm:$0xff]
      %v200 = vld [vmem:[%s1 + $0x68] sm:$0xff]
      %v201 = vld [vmem:[%s1 + $0x70] sm:$0xff]
      %v202 = vld [vmem:[%s1 + $0x78] sm:$0xff]
      %v203 = vlaneseq
      %v204 = vand.u32 %v203, 127
      %vm205 = vcmask 1047808
      %206 = vrot.lane.b32.xlu0 %v171, 32
      %v207 = vpop.permute.xlu0 %206
      %v208 = vsel %vm205, %v207, %v171
      %209 = vrot.lane.b32.xlu0 %v172, 32
      %v210 = vpop.permute.xlu0 %209
      %v211 = vsel %vm205, %v210, %v172
      %212 = vrot.lane.b32.xlu0 %v173, 32
      %v213 = vpop.permute.xlu0 %212
      %v214 = vsel %vm205, %v213, %v173
      %215 = vrot.lane.b32.xlu0 %v174, 32
      %v216 = vpop.permute.xlu0 %215
      %v217 = vsel %vm205, %v216, %v174
      %218 = vrot.lane.b32.xlu0 %v175, 32
      %v219 = vpop.permute.xlu0 %218
      %v220 = vsel %vm205, %v219, %v175
      %221 = vrot.lane.b32.xlu0 %v176, 32
      %v222 = vpop.permute.xlu0 %221
      %v223 = vsel %vm205, %v222, %v176
      %224 = vrot.lane.b32.xlu0 %v177, 32
      %v225 = vpop.permute.xlu0 %224
      %v226 = vsel %vm205, %v225, %v177
      %227 = vrot.lane.b32.xlu0 %v178, 32
      %v228 = vpop.permute.xlu0 %227
      %v229 = vsel %vm205, %v228, %v178
      %230 = vrot.lane.b32.xlu0 %v179, 32
      %v231 = vpop.permute.xlu0 %230
      %v232 = vsel %vm205, %v231, %v179
      %233 = vrot.lane.b32.xlu0 %v180, 32
      %v234 = vpop.permute.xlu0 %233
      %v235 = vsel %vm205, %v234, %v180
      %236 = vrot.lane.b32.xlu0 %v181, 32
      %v237 = vpop.permute.xlu0 %236
      %v238 = vsel %vm205, %v237, %v181
      %239 = vrot.lane.b32.xlu0 %v182, 32
      %v240 = vpop.permute.xlu0 %239
      %v241 = vsel %vm205, %v240, %v182
      %242 = vrot.lane.b32.xlu0 %v183, 32
      %v243 = vpop.permute.xlu0 %242
      %v244 = vsel %vm205, %v243, %v183
      %245 = vrot.lane.b32.xlu0 %v184, 32
      %v246 = vpop.permute.xlu0 %245
      %v247 = vsel %vm205, %v246, %v184
      %248 = vrot.lane.b32.xlu0 %v185, 32
      %v249 = vpop.permute.xlu0 %248
      %v250 = vsel %vm205, %v249, %v185
      %251 = vrot.lane.b32.xlu0 %v186, 32
      %v252 = vpop.permute.xlu0 %251
      %v253 = vsel %vm205, %v252, %v186
      %254 = vrot.lane.b32.xlu0 %v208, 32
      %v255 = vpop.permute.xlu0 %254
      %256 = vrot.lane.b32.xlu0 %v211, 32
      %v257 = vpop.permute.xlu0 %256
      %258 = vrot.lane.b32.xlu0 %v214, 32
      %v259 = vpop.permute.xlu0 %258
      %260 = vrot.lane.b32.xlu0 %v217, 32
      %v261 = vpop.permute.xlu0 %260
      %262 = vrot.lane.b32.xlu0 %v220, 32
      %v263 = vpop.permute.xlu0 %262
      %264 = vrot.lane.b32.xlu0 %v223, 32
      %v265 = vpop.permute.xlu0 %264
      %266 = vrot.lane.b32.xlu0 %v226, 32
      %v267 = vpop.permute.xlu0 %266
      %268 = vrot.lane.b32.xlu0 %v229, 32
      %v269 = vpop.permute.xlu0 %268
      %270 = vrot.lane.b32.xlu0 %v232, 32
      %v271 = vpop.permute.xlu0 %270
      %272 = vrot.lane.b32.xlu0 %v235, 32
      %v273 = vpop.permute.xlu0 %272
      %274 = vrot.lane.b32.xlu0 %v238, 32
      %v275 = vpop.permute.xlu0 %274
      %276 = vrot.lane.b32.xlu0 %v241, 32
      %v277 = vpop.permute.xlu0 %276
      %278 = vrot.lane.b32.xlu0 %v244, 32
      %v279 = vpop.permute.xlu0 %278
      %280 = vrot.lane.b32.xlu0 %v247, 32
      %v281 = vpop.permute.xlu0 %280
      %282 = vrot.lane.b32.xlu0 %v250, 32
      %v283 = vpop.permute.xlu0 %282
      %284 = vrot.lane.b32.xlu0 %v253, 32
      %v285 = vpop.permute.xlu0 %284
      %v286 = vsel %vm205, %v255, %v171
      %v287 = vsel %vm205, %v257, %v172
      %v288 = vsel %vm205, %v259, %v173
      %v289 = vsel %vm205, %v261, %v174
      %v290 = vsel %vm205, %v263, %v175
      %v291 = vsel %vm205, %v265, %v176
      %v292 = vsel %vm205, %v267, %v177
      %v293 = vsel %vm205, %v269, %v178
      %v294 = vsel %vm205, %v271, %v179
      %v295 = vsel %vm205, %v273, %v180
      %v296 = vsel %vm205, %v275, %v181
      %v297 = vsel %vm205, %v277, %v182
      %v298 = vsel %vm205, %v279, %v183
      %v299 = vsel %vm205, %v281, %v184
      %v300 = vsel %vm205, %v283, %v185
      %v301 = vsel %vm205, %v285, %v186
      %vm302 = vcmp.ge.s32.totalorder %v204, 2
      %319 = vrot.lane.b32.xlu0 %v286, 98
      %v320 = vpop.permute.xlu0 %319
      %321 = vrot.lane.b32.xlu0 %v287, 98
      %v322 = vpop.permute.xlu0 %321
      %323 = vrot.lane.b32.xlu0 %v288, 98
      %v324 = vpop.permute.xlu0 %323
      %325 = vrot.lane.b32.xlu0 %v289, 98
      %v326 = vpop.permute.xlu0 %325
      %327 = vrot.lane.b32.xlu0 %v290, 98
      %v328 = vpop.permute.xlu0 %327
      %329 = vrot.lane.b32.xlu0 %v291, 98
      %v330 = vpop.permute.xlu0 %329
      %331 = vrot.lane.b32.xlu0 %v292, 98
      %v332 = vpop.permute.xlu0 %331
      %333 = vrot.lane.b32.xlu0 %v293, 98
      %v334 = vpop.permute.xlu0 %333
      %335 = vrot.lane.b32.xlu0 %v294, 98
      %v336 = vpop.permute.xlu0 %335
      %337 = vrot.lane.b32.xlu0 %v295, 98
      %v338 = vpop.permute.xlu0 %337
      %339 = vrot.lane.b32.xlu0 %v296, 98
      %v340 = vpop.permute.xlu0 %339
      %341 = vrot.lane.b32.xlu0 %v297, 98
      %v342 = vpop.permute.xlu0 %341
      %343 = vrot.lane.b32.xlu0 %v298, 98
      %v344 = vpop.permute.xlu0 %343
      %345 = vrot.lane.b32.xlu0 %v299, 98
      %v346 = vpop.permute.xlu0 %345
      %347 = vrot.lane.b32.xlu0 %v300, 98
      %v348 = vpop.permute.xlu0 %347
      %349 = vrot.lane.b32.xlu0 %v301, 98
      %v350 = vpop.permute.xlu0 %349
      %v367 = vsel %vm302, %v320, 0.0
      %v368 = vsel %vm302, %v322, 0.0
      %v369 = vsel %vm302, %v324, 0.0
      %v370 = vsel %vm302, %v326, 0.0
      %v371 = vsel %vm302, %v328, 0.0
      %v372 = vsel %vm302, %v330, 0.0
      %v373 = vsel %vm302, %v332, 0.0
      %v374 = vsel %vm302, %v334, 0.0
      %v375 = vsel %vm302, %v336, 0.0
      %v376 = vsel %vm302, %v338, 0.0
      %v377 = vsel %vm302, %v340, 0.0
      %v378 = vsel %vm302, %v342, 0.0
      %v379 = vsel %vm302, %v344, 0.0
      %v380 = vsel %vm302, %v346, 0.0
      %v381 = vsel %vm302, %v348, 0.0
      %v382 = vsel %vm302, %v350, 0.0
      %384 = vset.pattern.permute.xlu0 0
      %385 = vperm.xlu0 %384, %v187
      %v386 = vpop.permute.xlu0 %385
      %389 = vset.pattern.permute.xlu0 0
      %390 = vperm.xlu0 %389, %v188
      %v391 = vpop.permute.xlu0 %390
      %394 = vset.pattern.permute.xlu0 0
      %395 = vperm.xlu0 %394, %v189
      %v396 = vpop.permute.xlu0 %395
      %399 = vset.pattern.permute.xlu0 0
      %400 = vperm.xlu0 %399, %v190
      %v401 = vpop.permute.xlu0 %400
      %404 = vset.pattern.permute.xlu0 0
      %405 = vperm.xlu0 %404, %v191
      %v406 = vpop.permute.xlu0 %405
      %409 = vset.pattern.permute.xlu0 0
      %410 = vperm.xlu0 %409, %v192
      %v411 = vpop.permute.xlu0 %410
      %414 = vset.pattern.permute.xlu0 0
      %415 = vperm.xlu0 %414, %v193
      %v416 = vpop.permute.xlu0 %415
      %419 = vset.pattern.permute.xlu0 0
      %420 = vperm.xlu0 %419, %v194
      %v421 = vpop.permute.xlu0 %420
      %424 = vset.pattern.permute.xlu0 0
      %425 = vperm.xlu0 %424, %v195
      %v426 = vpop.permute.xlu0 %425
      %429 = vset.pattern.permute.xlu0 0
      %430 = vperm.xlu0 %429, %v196
      %v431 = vpop.permute.xlu0 %430
      %434 = vset.pattern.permute.xlu0 0
      %435 = vperm.xlu0 %434, %v197
      %v436 = vpop.permute.xlu0 %435
      %439 = vset.pattern.permute.xlu0 0
      %440 = vperm.xlu0 %439, %v198
      %v441 = vpop.permute.xlu0 %440
      %444 = vset.pattern.permute.xlu0 0
      %445 = vperm.xlu0 %444, %v199
      %v446 = vpop.permute.xlu0 %445
      %449 = vset.pattern.permute.xlu0 0
      %450 = vperm.xlu0 %449, %v200
      %v451 = vpop.permute.xlu0 %450
      %454 = vset.pattern.permute.xlu0 0
      %455 = vperm.xlu0 %454, %v201
      %v456 = vpop.permute.xlu0 %455
      %459 = vset.pattern.permute.xlu0 0
      %460 = vperm.xlu0 %459, %v202
      %v461 = vpop.permute.xlu0 %460
      %v463 = vmul.f32 %v367, %v386
      %v464 = vmul.f32 %v368, %v391
      %v465 = vmul.f32 %v369, %v396
      %v466 = vmul.f32 %v370, %v401
      %v467 = vmul.f32 %v371, %v406
      %v468 = vmul.f32 %v372, %v411
      %v469 = vmul.f32 %v373, %v416
      %v470 = vmul.f32 %v374, %v421
      %v471 = vmul.f32 %v375, %v426
      %v472 = vmul.f32 %v376, %v431
      %v473 = vmul.f32 %v377, %v436
      %v474 = vmul.f32 %v378, %v441
      %v475 = vmul.f32 %v379, %v446
      %v476 = vmul.f32 %v380, %v451
      %v477 = vmul.f32 %v381, %v456
      %v478 = vmul.f32 %v382, %v461
      %v479 = vld [vmem:[%s2] sm:$0xff]
      %v480 = vld [vmem:[%s2 + $0x8] sm:$0xff]
      %v481 = vld [vmem:[%s2 + $0x10] sm:$0xff]
      %v482 = vld [vmem:[%s2 + $0x18] sm:$0xff]
      %v483 = vld [vmem:[%s2 + $0x20] sm:$0xff]
      %v484 = vld [vmem:[%s2 + $0x28] sm:$0xff]
      %v485 = vld [vmem:[%s2 + $0x30] sm:$0xff]
      %v486 = vld [vmem:[%s2 + $0x38] sm:$0xff]
      %v487 = vld [vmem:[%s2 + $0x40] sm:$0xff]
      %v488 = vld [vmem:[%s2 + $0x48] sm:$0xff]
      %v489 = vld [vmem:[%s2 + $0x50] sm:$0xff]
      %v490 = vld [vmem:[%s2 + $0x58] sm:$0xff]
      %v491 = vld [vmem:[%s2 + $0x60] sm:$0xff]
      %v492 = vld [vmem:[%s2 + $0x68] sm:$0xff]
      %v493 = vld [vmem:[%s2 + $0x70] sm:$0xff]
      %v494 = vld [vmem:[%s2 + $0x78] sm:$0xff]
      %496 = vset.pattern.permute.xlu0 0
      %497 = vperm.xlu0 %496, %v479
      %v498 = vpop.permute.xlu0 %497
      %501 = vset.pattern.permute.xlu0 0
      %502 = vperm.xlu0 %501, %v480
      %v503 = vpop.permute.xlu0 %502
      %506 = vset.pattern.permute.xlu0 0
      %507 = vperm.xlu0 %506, %v481
      %v508 = vpop.permute.xlu0 %507
      %511 = vset.pattern.permute.xlu0 0
      %512 = vperm.xlu0 %511, %v482
      %v513 = vpop.permute.xlu0 %512
      %516 = vset.pattern.permute.xlu0 0
      %517 = vperm.xlu0 %516, %v483
      %v518 = vpop.permute.xlu0 %517
      %521 = vset.pattern.permute.xlu0 0
      %522 = vperm.xlu0 %521, %v484
      %v523 = vpop.permute.xlu0 %522
      %526 = vset.pattern.permute.xlu0 0
      %527 = vperm.xlu0 %526, %v485
      %v528 = vpop.permute.xlu0 %527
      %531 = vset.pattern.permute.xlu0 0
      %532 = vperm.xlu0 %531, %v486
      %v533 = vpop.permute.xlu0 %532
      %536 = vset.pattern.permute.xlu0 0
      %537 = vperm.xlu0 %536, %v487
      %v538 = vpop.permute.xlu0 %537
      %541 = vset.pattern.permute.xlu0 0
      %542 = vperm.xlu0 %541, %v488
      %v543 = vpop.permute.xlu0 %542
      %546 = vset.pattern.permute.xlu0 0
      %547 = vperm.xlu0 %546, %v489
      %v548 = vpop.permute.xlu0 %547
      %551 = vset.pattern.permute.xlu0 0
      %552 = vperm.xlu0 %551, %v490
      %v553 = vpop.permute.xlu0 %552
      %556 = vset.pattern.permute.xlu0 0
      %557 = vperm.xlu0 %556, %v491
      %v558 = vpop.permute.xlu0 %557
      %561 = vset.pattern.permute.xlu0 0
      %562 = vperm.xlu0 %561, %v492
      %v563 = vpop.permute.xlu0 %562
      %566 = vset.pattern.permute.xlu0 0
      %567 = vperm.xlu0 %566, %v493
      %v568 = vpop.permute.xlu0 %567
      %571 = vset.pattern.permute.xlu0 0
      %572 = vperm.xlu0 %571, %v494
      %v573 = vpop.permute.xlu0 %572
      %v575 = vadd.f32 %v463, %v498
      %v576 = vadd.f32 %v464, %v503
      %v577 = vadd.f32 %v465, %v508
      %v578 = vadd.f32 %v466, %v513
      %v579 = vadd.f32 %v467, %v518
      %v580 = vadd.f32 %v468, %v523
      %v581 = vadd.f32 %v469, %v528
      %v582 = vadd.f32 %v470, %v533
      %v583 = vadd.f32 %v471, %v538
      %v584 = vadd.f32 %v472, %v543
      %v585 = vadd.f32 %v473, %v548
      %v586 = vadd.f32 %v474, %v553
      %v587 = vadd.f32 %v475, %v558
      %v588 = vadd.f32 %v476, %v563
      %v589 = vadd.f32 %v477, %v568
      %v590 = vadd.f32 %v478, %v573
      %vm591 = vcmp.ge.s32.totalorder %v204, 1
      %592 = vrot.lane.b32.xlu0 %v286, 97
      %v593 = vpop.permute.xlu0 %592
      %594 = vrot.lane.b32.xlu0 %v287, 97
      %v595 = vpop.permute.xlu0 %594
      %596 = vrot.lane.b32.xlu0 %v288, 97
      %v597 = vpop.permute.xlu0 %596
      %598 = vrot.lane.b32.xlu0 %v289, 97
      %v599 = vpop.permute.xlu0 %598
      %600 = vrot.lane.b32.xlu0 %v290, 97
      %v601 = vpop.permute.xlu0 %600
      %602 = vrot.lane.b32.xlu0 %v291, 97
      %v603 = vpop.permute.xlu0 %602
      %604 = vrot.lane.b32.xlu0 %v292, 97
      %v605 = vpop.permute.xlu0 %604
      %606 = vrot.lane.b32.xlu0 %v293, 97
      %v607 = vpop.permute.xlu0 %606
      %608 = vrot.lane.b32.xlu0 %v294, 97
      %v609 = vpop.permute.xlu0 %608
      %610 = vrot.lane.b32.xlu0 %v295, 97
      %v611 = vpop.permute.xlu0 %610
      %612 = vrot.lane.b32.xlu0 %v296, 97
      %v613 = vpop.permute.xlu0 %612
      %614 = vrot.lane.b32.xlu0 %v297, 97
      %v615 = vpop.permute.xlu0 %614
      %616 = vrot.lane.b32.xlu0 %v298, 97
      %v617 = vpop.permute.xlu0 %616
      %618 = vrot.lane.b32.xlu0 %v299, 97
      %v619 = vpop.permute.xlu0 %618
      %620 = vrot.lane.b32.xlu0 %v300, 97
      %v621 = vpop.permute.xlu0 %620
      %622 = vrot.lane.b32.xlu0 %v301, 97
      %v623 = vpop.permute.xlu0 %622
      %v640 = vsel %vm591, %v593, 0.0
      %v641 = vsel %vm591, %v595, 0.0
      %v642 = vsel %vm591, %v597, 0.0
      %v643 = vsel %vm591, %v599, 0.0
      %v644 = vsel %vm591, %v601, 0.0
      %v645 = vsel %vm591, %v603, 0.0
      %v646 = vsel %vm591, %v605, 0.0
      %v647 = vsel %vm591, %v607, 0.0
      %v648 = vsel %vm591, %v609, 0.0
      %v649 = vsel %vm591, %v611, 0.0
      %v650 = vsel %vm591, %v613, 0.0
      %v651 = vsel %vm591, %v615, 0.0
      %v652 = vsel %vm591, %v617, 0.0
      %v653 = vsel %vm591, %v619, 0.0
      %v654 = vsel %vm591, %v621, 0.0
      %v655 = vsel %vm591, %v623, 0.0
      %656 = vset.pattern.permute.xlu0 1
      %657 = vperm.xlu0 %656, %v187
      %v658 = vpop.permute.xlu0 %657
      %660 = vset.pattern.permute.xlu0 1
      %661 = vperm.xlu0 %660, %v188
      %v662 = vpop.permute.xlu0 %661
      %664 = vset.pattern.permute.xlu0 1
      %665 = vperm.xlu0 %664, %v189
      %v666 = vpop.permute.xlu0 %665
      %668 = vset.pattern.permute.xlu0 1
      %669 = vperm.xlu0 %668, %v190
      %v670 = vpop.permute.xlu0 %669
      %672 = vset.pattern.permute.xlu0 1
      %673 = vperm.xlu0 %672, %v191
      %v674 = vpop.permute.xlu0 %673
      %676 = vset.pattern.permute.xlu0 1
      %677 = vperm.xlu0 %676, %v192
      %v678 = vpop.permute.xlu0 %677
      %680 = vset.pattern.permute.xlu0 1
      %681 = vperm.xlu0 %680, %v193
      %v682 = vpop.permute.xlu0 %681
      %684 = vset.pattern.permute.xlu0 1
      %685 = vperm.xlu0 %684, %v194
      %v686 = vpop.permute.xlu0 %685
      %688 = vset.pattern.permute.xlu0 1
      %689 = vperm.xlu0 %688, %v195
      %v690 = vpop.permute.xlu0 %689
      %692 = vset.pattern.permute.xlu0 1
      %693 = vperm.xlu0 %692, %v196
      %v694 = vpop.permute.xlu0 %693
      %696 = vset.pattern.permute.xlu0 1
      %697 = vperm.xlu0 %696, %v197
      %v698 = vpop.permute.xlu0 %697
      %700 = vset.pattern.permute.xlu0 1
      %701 = vperm.xlu0 %700, %v198
      %v702 = vpop.permute.xlu0 %701
      %704 = vset.pattern.permute.xlu0 1
      %705 = vperm.xlu0 %704, %v199
      %v706 = vpop.permute.xlu0 %705
      %708 = vset.pattern.permute.xlu0 1
      %709 = vperm.xlu0 %708, %v200
      %v710 = vpop.permute.xlu0 %709
      %712 = vset.pattern.permute.xlu0 1
      %713 = vperm.xlu0 %712, %v201
      %v714 = vpop.permute.xlu0 %713
      %716 = vset.pattern.permute.xlu0 1
      %717 = vperm.xlu0 %716, %v202
      %v718 = vpop.permute.xlu0 %717
      %v720 = vmul.f32 %v640, %v658
      %v721 = vmul.f32 %v641, %v662
      %v722 = vmul.f32 %v642, %v666
      %v723 = vmul.f32 %v643, %v670
      %v724 = vmul.f32 %v644, %v674
      %v725 = vmul.f32 %v645, %v678
      %v726 = vmul.f32 %v646, %v682
      %v727 = vmul.f32 %v647, %v686
      %v728 = vmul.f32 %v648, %v690
      %v729 = vmul.f32 %v649, %v694
      %v730 = vmul.f32 %v650, %v698
      %v731 = vmul.f32 %v651, %v702
      %v732 = vmul.f32 %v652, %v706
      %v733 = vmul.f32 %v653, %v710
      %v734 = vmul.f32 %v654, %v714
      %v735 = vmul.f32 %v655, %v718
      %v736 = vadd.f32 %v575, %v720
      %v737 = vadd.f32 %v576, %v721
      %v738 = vadd.f32 %v577, %v722
      %v739 = vadd.f32 %v578, %v723
      %v740 = vadd.f32 %v579, %v724
      %v741 = vadd.f32 %v580, %v725
      %v742 = vadd.f32 %v581, %v726
      %v743 = vadd.f32 %v582, %v727
      %v744 = vadd.f32 %v583, %v728
      %v745 = vadd.f32 %v584, %v729
      %v746 = vadd.f32 %v585, %v730
      %v747 = vadd.f32 %v586, %v731
      %v748 = vadd.f32 %v587, %v732
      %v749 = vadd.f32 %v588, %v733
      %v750 = vadd.f32 %v589, %v734
      %v751 = vadd.f32 %v590, %v735
      %752 = vset.pattern.permute.xlu0 2
      %753 = vperm.xlu0 %752, %v187
      %v754 = vpop.permute.xlu0 %753
      %756 = vset.pattern.permute.xlu0 2
      %757 = vperm.xlu0 %756, %v188
      %v758 = vpop.permute.xlu0 %757
      %760 = vset.pattern.permute.xlu0 2
      %761 = vperm.xlu0 %760, %v189
      %v762 = vpop.permute.xlu0 %761
      %764 = vset.pattern.permute.xlu0 2
      %765 = vperm.xlu0 %764, %v190
      %v766 = vpop.permute.xlu0 %765
      %768 = vset.pattern.permute.xlu0 2
      %769 = vperm.xlu0 %768, %v191
      %v770 = vpop.permute.xlu0 %769
      %772 = vset.pattern.permute.xlu0 2
      %773 = vperm.xlu0 %772, %v192
      %v774 = vpop.permute.xlu0 %773
      %776 = vset.pattern.permute.xlu0 2
      %777 = vperm.xlu0 %776, %v193
      %v778 = vpop.permute.xlu0 %777
      %780 = vset.pattern.permute.xlu0 2
      %781 = vperm.xlu0 %780, %v194
      %v782 = vpop.permute.xlu0 %781
      %784 = vset.pattern.permute.xlu0 2
      %785 = vperm.xlu0 %784, %v195
      %v786 = vpop.permute.xlu0 %785
      %788 = vset.pattern.permute.xlu0 2
      %789 = vperm.xlu0 %788, %v196
      %v790 = vpop.permute.xlu0 %789
      %792 = vset.pattern.permute.xlu0 2
      %793 = vperm.xlu0 %792, %v197
      %v794 = vpop.permute.xlu0 %793
      %796 = vset.pattern.permute.xlu0 2
      %797 = vperm.xlu0 %796, %v198
      %v798 = vpop.permute.xlu0 %797
      %800 = vset.pattern.permute.xlu0 2
      %801 = vperm.xlu0 %800, %v199
      %v802 = vpop.permute.xlu0 %801
      %804 = vset.pattern.permute.xlu0 2
      %805 = vperm.xlu0 %804, %v200
      %v806 = vpop.permute.xlu0 %805
      %808 = vset.pattern.permute.xlu0 2
      %809 = vperm.xlu0 %808, %v201
      %v810 = vpop.permute.xlu0 %809
      %812 = vset.pattern.permute.xlu0 2
      %813 = vperm.xlu0 %812, %v202
      %v814 = vpop.permute.xlu0 %813
      %v816 = vmul.f32 %v171, %v754
      %v817 = vmul.f32 %v172, %v758
      %v818 = vmul.f32 %v173, %v762
      %v819 = vmul.f32 %v174, %v766
      %v820 = vmul.f32 %v175, %v770
      %v821 = vmul.f32 %v176, %v774
      %v822 = vmul.f32 %v177, %v778
      %v823 = vmul.f32 %v178, %v782
      %v824 = vmul.f32 %v179, %v786
      %v825 = vmul.f32 %v180, %v790
      %v826 = vmul.f32 %v181, %v794
      %v827 = vmul.f32 %v182, %v798
      %v828 = vmul.f32 %v183, %v802
      %v829 = vmul.f32 %v184, %v806
      %v830 = vmul.f32 %v185, %v810
      %v831 = vmul.f32 %v186, %v814
      %v832 = vadd.f32 %v736, %v816
      %v833 = vadd.f32 %v737, %v817
      %v834 = vadd.f32 %v738, %v818
      %v835 = vadd.f32 %v739, %v819
      %v836 = vadd.f32 %v740, %v820
      %v837 = vadd.f32 %v741, %v821
      %v838 = vadd.f32 %v742, %v822
      %v839 = vadd.f32 %v743, %v823
      %v840 = vadd.f32 %v744, %v824
      %v841 = vadd.f32 %v745, %v825
      %v842 = vadd.f32 %v746, %v826
      %v843 = vadd.f32 %v747, %v827
      %v844 = vadd.f32 %v748, %v828
      %v845 = vadd.f32 %v749, %v829
      %v846 = vadd.f32 %v750, %v830
      %v847 = vadd.f32 %v751, %v831
      %vm848 = vcmp.lt.s32.totalorder %v204, 31
      %849 = vrot.lane.b32.xlu0 %v286, 127
      %v850 = vpop.permute.xlu0 %849
      %851 = vrot.lane.b32.xlu0 %v287, 127
      %v852 = vpop.permute.xlu0 %851
      %853 = vrot.lane.b32.xlu0 %v288, 127
      %v854 = vpop.permute.xlu0 %853
      %855 = vrot.lane.b32.xlu0 %v289, 127
      %v856 = vpop.permute.xlu0 %855
      %857 = vrot.lane.b32.xlu0 %v290, 127
      %v858 = vpop.permute.xlu0 %857
      %859 = vrot.lane.b32.xlu0 %v291, 127
      %v860 = vpop.permute.xlu0 %859
      %861 = vrot.lane.b32.xlu0 %v292, 127
      %v862 = vpop.permute.xlu0 %861
      %863 = vrot.lane.b32.xlu0 %v293, 127
      %v864 = vpop.permute.xlu0 %863
      %865 = vrot.lane.b32.xlu0 %v294, 127
      %v866 = vpop.permute.xlu0 %865
      %867 = vrot.lane.b32.xlu0 %v295, 127
      %v868 = vpop.permute.xlu0 %867
      %869 = vrot.lane.b32.xlu0 %v296, 127
      %v870 = vpop.permute.xlu0 %869
      %871 = vrot.lane.b32.xlu0 %v297, 127
      %v872 = vpop.permute.xlu0 %871
      %873 = vrot.lane.b32.xlu0 %v298, 127
      %v874 = vpop.permute.xlu0 %873
      %875 = vrot.lane.b32.xlu0 %v299, 127
      %v876 = vpop.permute.xlu0 %875
      %877 = vrot.lane.b32.xlu0 %v300, 127
      %v878 = vpop.permute.xlu0 %877
      %879 = vrot.lane.b32.xlu0 %v301, 127
      %v880 = vpop.permute.xlu0 %879
      %v897 = vsel %vm848, %v850, 0.0
      %v898 = vsel %vm848, %v852, 0.0
      %v899 = vsel %vm848, %v854, 0.0
      %v900 = vsel %vm848, %v856, 0.0
      %v901 = vsel %vm848, %v858, 0.0
      %v902 = vsel %vm848, %v860, 0.0
      %v903 = vsel %vm848, %v862, 0.0
      %v904 = vsel %vm848, %v864, 0.0
      %v905 = vsel %vm848, %v866, 0.0
      %v906 = vsel %vm848, %v868, 0.0
      %v907 = vsel %vm848, %v870, 0.0
      %v908 = vsel %vm848, %v872, 0.0
      %v909 = vsel %vm848, %v874, 0.0
      %v910 = vsel %vm848, %v876, 0.0
      %v911 = vsel %vm848, %v878, 0.0
      %v912 = vsel %vm848, %v880, 0.0
      %913 = vset.pattern.permute.xlu0 3
      %914 = vperm.xlu0 %913, %v187
      %v915 = vpop.permute.xlu0 %914
      %917 = vset.pattern.permute.xlu0 3
      %918 = vperm.xlu0 %917, %v188
      %v919 = vpop.permute.xlu0 %918
      %921 = vset.pattern.permute.xlu0 3
      %922 = vperm.xlu0 %921, %v189
      %v923 = vpop.permute.xlu0 %922
      %925 = vset.pattern.permute.xlu0 3
      %926 = vperm.xlu0 %925, %v190
      %v927 = vpop.permute.xlu0 %926
      %929 = vset.pattern.permute.xlu0 3
      %930 = vperm.xlu0 %929, %v191
      %v931 = vpop.permute.xlu0 %930
      %933 = vset.pattern.permute.xlu0 3
      %934 = vperm.xlu0 %933, %v192
      %v935 = vpop.permute.xlu0 %934
      %937 = vset.pattern.permute.xlu0 3
      %938 = vperm.xlu0 %937, %v193
      %v939 = vpop.permute.xlu0 %938
      %941 = vset.pattern.permute.xlu0 3
      %942 = vperm.xlu0 %941, %v194
      %v943 = vpop.permute.xlu0 %942
      %945 = vset.pattern.permute.xlu0 3
      %946 = vperm.xlu0 %945, %v195
      %v947 = vpop.permute.xlu0 %946
      %949 = vset.pattern.permute.xlu0 3
      %950 = vperm.xlu0 %949, %v196
      %v951 = vpop.permute.xlu0 %950
      %953 = vset.pattern.permute.xlu0 3
      %954 = vperm.xlu0 %953, %v197
      %v955 = vpop.permute.xlu0 %954
      %957 = vset.pattern.permute.xlu0 3
      %958 = vperm.xlu0 %957, %v198
      %v959 = vpop.permute.xlu0 %958
      %961 = vset.pattern.permute.xlu0 3
      %962 = vperm.xlu0 %961, %v199
      %v963 = vpop.permute.xlu0 %962
      %965 = vset.pattern.permute.xlu0 3
      %966 = vperm.xlu0 %965, %v200
      %v967 = vpop.permute.xlu0 %966
      %969 = vset.pattern.permute.xlu0 3
      %970 = vperm.xlu0 %969, %v201
      %v971 = vpop.permute.xlu0 %970
      %973 = vset.pattern.permute.xlu0 3
      %974 = vperm.xlu0 %973, %v202
      %v975 = vpop.permute.xlu0 %974
      %v977 = vmul.f32 %v897, %v915
      %v978 = vmul.f32 %v898, %v919
      %v979 = vmul.f32 %v899, %v923
      %v980 = vmul.f32 %v900, %v927
      %v981 = vmul.f32 %v901, %v931
      %v982 = vmul.f32 %v902, %v935
      %v983 = vmul.f32 %v903, %v939
      %v984 = vmul.f32 %v904, %v943
      %v985 = vmul.f32 %v905, %v947
      %v986 = vmul.f32 %v906, %v951
      %v987 = vmul.f32 %v907, %v955
      %v988 = vmul.f32 %v908, %v959
      %v989 = vmul.f32 %v909, %v963
      %v990 = vmul.f32 %v910, %v967
      %v991 = vmul.f32 %v911, %v971
      %v992 = vmul.f32 %v912, %v975
      %v993 = vadd.f32 %v832, %v977
      %v994 = vadd.f32 %v833, %v978
      %v995 = vadd.f32 %v834, %v979
      %v996 = vadd.f32 %v835, %v980
      %v997 = vadd.f32 %v836, %v981
      %v998 = vadd.f32 %v837, %v982
      %v999 = vadd.f32 %v838, %v983
      %v1000 = vadd.f32 %v839, %v984
      %v1001 = vadd.f32 %v840, %v985
      %v1002 = vadd.f32 %v841, %v986
      %v1003 = vadd.f32 %v842, %v987
      %v1004 = vadd.f32 %v843, %v988
      %v1005 = vadd.f32 %v844, %v989
      %v1006 = vadd.f32 %v845, %v990
      %v1007 = vadd.f32 %v846, %v991
      %v1008 = vadd.f32 %v847, %v992
      %vm1009 = vcmp.lt.s32.totalorder %v204, 30
      %1010 = vrot.lane.b32.xlu0 %v286, 126
      %v1011 = vpop.permute.xlu0 %1010
      %1012 = vrot.lane.b32.xlu0 %v287, 126
      %v1013 = vpop.permute.xlu0 %1012
      %1014 = vrot.lane.b32.xlu0 %v288, 126
      %v1015 = vpop.permute.xlu0 %1014
      %1016 = vrot.lane.b32.xlu0 %v289, 126
      %v1017 = vpop.permute.xlu0 %1016
      %1018 = vrot.lane.b32.xlu0 %v290, 126
      %v1019 = vpop.permute.xlu0 %1018
      %1020 = vrot.lane.b32.xlu0 %v291, 126
      %v1021 = vpop.permute.xlu0 %1020
      %1022 = vrot.lane.b32.xlu0 %v292, 126
      %v1023 = vpop.permute.xlu0 %1022
      %1024 = vrot.lane.b32.xlu0 %v293, 126
      %v1025 = vpop.permute.xlu0 %1024
      %1026 = vrot.lane.b32.xlu0 %v294, 126
      %v1027 = vpop.permute.xlu0 %1026
      %1028 = vrot.lane.b32.xlu0 %v295, 126
      %v1029 = vpop.permute.xlu0 %1028
      %1030 = vrot.lane.b32.xlu0 %v296, 126
      %v1031 = vpop.permute.xlu0 %1030
      %1032 = vrot.lane.b32.xlu0 %v297, 126
      %v1033 = vpop.permute.xlu0 %1032
      %1034 = vrot.lane.b32.xlu0 %v298, 126
      %v1035 = vpop.permute.xlu0 %1034
      %1036 = vrot.lane.b32.xlu0 %v299, 126
      %v1037 = vpop.permute.xlu0 %1036
      %1038 = vrot.lane.b32.xlu0 %v300, 126
      %v1039 = vpop.permute.xlu0 %1038
      %1040 = vrot.lane.b32.xlu0 %v301, 126
      %v1041 = vpop.permute.xlu0 %1040
      %v1058 = vsel %vm1009, %v1011, 0.0
      %v1059 = vsel %vm1009, %v1013, 0.0
      %v1060 = vsel %vm1009, %v1015, 0.0
      %v1061 = vsel %vm1009, %v1017, 0.0
      %v1062 = vsel %vm1009, %v1019, 0.0
      %v1063 = vsel %vm1009, %v1021, 0.0
      %v1064 = vsel %vm1009, %v1023, 0.0
      %v1065 = vsel %vm1009, %v1025, 0.0
      %v1066 = vsel %vm1009, %v1027, 0.0
      %v1067 = vsel %vm1009, %v1029, 0.0
      %v1068 = vsel %vm1009, %v1031, 0.0
      %v1069 = vsel %vm1009, %v1033, 0.0
      %v1070 = vsel %vm1009, %v1035, 0.0
      %v1071 = vsel %vm1009, %v1037, 0.0
      %v1072 = vsel %vm1009, %v1039, 0.0
      %v1073 = vsel %vm1009, %v1041, 0.0
      %1074 = vset.pattern.permute.xlu0 4
      %1075 = vperm.xlu0 %1074, %v187
      %v1076 = vpop.permute.xlu0 %1075
      %1078 = vset.pattern.permute.xlu0 4
      %1079 = vperm.xlu0 %1078, %v188
      %v1080 = vpop.permute.xlu0 %1079
      %1082 = vset.pattern.permute.xlu0 4
      %1083 = vperm.xlu0 %1082, %v189
      %v1084 = vpop.permute.xlu0 %1083
      %1086 = vset.pattern.permute.xlu0 4
      %1087 = vperm.xlu0 %1086, %v190
      %v1088 = vpop.permute.xlu0 %1087
      %1090 = vset.pattern.permute.xlu0 4
      %1091 = vperm.xlu0 %1090, %v191
      %v1092 = vpop.permute.xlu0 %1091
      %1094 = vset.pattern.permute.xlu0 4
      %1095 = vperm.xlu0 %1094, %v192
      %v1096 = vpop.permute.xlu0 %1095
      %1098 = vset.pattern.permute.xlu0 4
      %1099 = vperm.xlu0 %1098, %v193
      %v1100 = vpop.permute.xlu0 %1099
      %1102 = vset.pattern.permute.xlu0 4
      %1103 = vperm.xlu0 %1102, %v194
      %v1104 = vpop.permute.xlu0 %1103
      %1106 = vset.pattern.permute.xlu0 4
      %1107 = vperm.xlu0 %1106, %v195
      %v1108 = vpop.permute.xlu0 %1107
      %1110 = vset.pattern.permute.xlu0 4
      %1111 = vperm.xlu0 %1110, %v196
      %v1112 = vpop.permute.xlu0 %1111
      %1114 = vset.pattern.permute.xlu0 4
      %1115 = vperm.xlu0 %1114, %v197
      %v1116 = vpop.permute.xlu0 %1115
      %1118 = vset.pattern.permute.xlu0 4
      %1119 = vperm.xlu0 %1118, %v198
      %v1120 = vpop.permute.xlu0 %1119
      %1122 = vset.pattern.permute.xlu0 4
      %1123 = vperm.xlu0 %1122, %v199
      %v1124 = vpop.permute.xlu0 %1123
      %1126 = vset.pattern.permute.xlu0 4
      %1127 = vperm.xlu0 %1126, %v200
      %v1128 = vpop.permute.xlu0 %1127
      %1130 = vset.pattern.permute.xlu0 4
      %1131 = vperm.xlu0 %1130, %v201
      %v1132 = vpop.permute.xlu0 %1131
      %1134 = vset.pattern.permute.xlu0 4
      %1135 = vperm.xlu0 %1134, %v202
      %v1136 = vpop.permute.xlu0 %1135
      %v1138 = vmul.f32 %v1058, %v1076
      %v1139 = vmul.f32 %v1059, %v1080
      %v1140 = vmul.f32 %v1060, %v1084
      %v1141 = vmul.f32 %v1061, %v1088
      %v1142 = vmul.f32 %v1062, %v1092
      %v1143 = vmul.f32 %v1063, %v1096
      %v1144 = vmul.f32 %v1064, %v1100
      %v1145 = vmul.f32 %v1065, %v1104
      %v1146 = vmul.f32 %v1066, %v1108
      %v1147 = vmul.f32 %v1067, %v1112
      %v1148 = vmul.f32 %v1068, %v1116
      %v1149 = vmul.f32 %v1069, %v1120
      %v1150 = vmul.f32 %v1070, %v1124
      %v1151 = vmul.f32 %v1071, %v1128
      %v1152 = vmul.f32 %v1072, %v1132
      %v1153 = vmul.f32 %v1073, %v1136
      %v1154 = vadd.f32 %v993, %v1138
      %v1155 = vadd.f32 %v994, %v1139
      %v1156 = vadd.f32 %v995, %v1140
      %v1157 = vadd.f32 %v996, %v1141
      %v1158 = vadd.f32 %v997, %v1142
      %v1159 = vadd.f32 %v998, %v1143
      %v1160 = vadd.f32 %v999, %v1144
      %v1161 = vadd.f32 %v1000, %v1145
      %v1162 = vadd.f32 %v1001, %v1146
      %v1163 = vadd.f32 %v1002, %v1147
      %v1164 = vadd.f32 %v1003, %v1148
      %v1165 = vadd.f32 %v1004, %v1149
      %v1166 = vadd.f32 %v1005, %v1150
      %v1167 = vadd.f32 %v1006, %v1151
      %v1168 = vadd.f32 %v1007, %v1152
      %v1169 = vadd.f32 %v1008, %v1153
      %vm1170 = vcmask 261120
      %1171 = vst.msk [vmem:[%s170] sm:$0xff] %vm1170, %v1154
      %1172 = vst.msk [vmem:[%s170 + $0x8] sm:$0xff] %vm1170, %v1155
      %1173 = vst.msk [vmem:[%s170 + $0x10] sm:$0xff] %vm1170, %v1156
      %1174 = vst.msk [vmem:[%s170 + $0x18] sm:$0xff] %vm1170, %v1157
      %1175 = vst.msk [vmem:[%s170 + $0x20] sm:$0xff] %vm1170, %v1158
      %1176 = vst.msk [vmem:[%s170 + $0x28] sm:$0xff] %vm1170, %v1159
      %1177 = vst.msk [vmem:[%s170 + $0x30] sm:$0xff] %vm1170, %v1160
      %1178 = vst.msk [vmem:[%s170 + $0x38] sm:$0xff] %vm1170, %v1161
      %1179 = vst.msk [vmem:[%s170 + $0x40] sm:$0xff] %vm1170, %v1162
      %1180 = vst.msk [vmem:[%s170 + $0x48] sm:$0xff] %vm1170, %v1163
      %1181 = vst.msk [vmem:[%s170 + $0x50] sm:$0xff] %vm1170, %v1164
      %1182 = vst.msk [vmem:[%s170 + $0x58] sm:$0xff] %vm1170, %v1165
      %1183 = vst.msk [vmem:[%s170 + $0x60] sm:$0xff] %vm1170, %v1166
      %1184 = vst.msk [vmem:[%s170 + $0x68] sm:$0xff] %vm1170, %v1167
      %1185 = vst.msk [vmem:[%s170 + $0x70] sm:$0xff] %vm1170, %v1168
      %1186 = vst.msk [vmem:[%s170 + $0x78] sm:$0xff] %vm1170, %v1169
      %p1187 = scmp.lt.s32.totalorder %s14, 1
      %s1188 = scalar_select %p1187, %s14, 1
      %s1189 = smul.addr %s1188, 16
      %s1190 = smul.addr %s1189, 8
      %s1191 = scalar_lea.vmem %s3, %s1190
      // Predicated region
      $region33: #{depthwise_conv1d.1} parent=31 // pred_check
        %p1192 = pneg %p100
      $region34: #{depthwise_conv1d.1} parent=31 // pred_check_branch
        %1194 = sbr.rel (%p1192) target = $region36
      $region35: #{depthwise_conv1d.1} parent=31 // pred_region
        _
      $region36: #{depthwise_conv1d.1} parent=31 // pred_fallthru
        _
    $region32: #{depthwise_conv1d.1} parent=5 // pred_fallthru
      _
    %p1195 = scmp.le.s32.totalorder 2, %s9
    // Predicated region
    $region37: #{depthwise_conv1d.1} parent=5 // pred_check
      %p1196 = pneg %p1195
    $region38: #{depthwise_conv1d.1} parent=5 // pred_check_branch
      %1198 = sbr.rel (%p1196) target = $region40
    $region39: #{depthwise_conv1d.1} parent=5 // pred_region
      %s1199 = ssub.s32 %s9, 2
      // Predicated region
      $region41: #{depthwise_conv1d.1} parent=39 // pred_check
        %p1200 = pneg %p106
      $region42: #{depthwise_conv1d.1} parent=39 // pred_check_branch
        %1202 = sbr.rel (%p1200) target = $region44
      $region43: #{depthwise_conv1d.1} parent=39 // pred_region
        %p1203 = scmp.lt.s32.totalorder %s15, 1
        %s1204 = scalar_select %p1203, %s15, 1
        %s1205 = smul.addr %s1204, 16
        %s1206 = smul.addr %s1205, 8
        %s1207 = scalar_lea.vmem %s3, %s1206
      $region44: #{depthwise_conv1d.1} parent=39 // pred_fallthru
        _
    $region40: #{depthwise_conv1d.1} parent=5 // pred_fallthru
      _
  $region6: #{depthwise_conv1d.1} parent=0 // loop_footer
    %s13 = sadd.s32 1, %s9
  $region7: #{depthwise_conv1d.1} parent=0 // loop_footer_branch
    %8 = sbr.rel target = $region3
  $region8: #{depthwise_conv1d.1} parent=0 // loop_exit
    _

</llo_original>
